<compile_context>
chip_gen: v5e
topology: v5e:2x2
jax: 0.10.0
libtpu: 0.0.40
codegen_flags: <defaults>
</compile_context>

<pallas_src>
import jax
import jax.numpy as jnp
from jax.experimental import pallas as pl
from jax.experimental.pallas import tpu as pltpu


def _round_up(x, m):
    return ((x + m - 1) // m) * m


def _sublane_pack(dtype):
    itemsize = jnp.dtype(dtype).itemsize
    if itemsize == 1:
        return 32
    if itemsize == 2:
        return 16
    return 8


def _make_pack(weights, biases, dtype, *, tn_max=512, tk_max=1024):
    """Pre-pad / pre-cast a list of [D, N_i] weights (+ optional biases).

    Each output segment is padded to a multiple of tn independently, so every
    segment occupies whole output tiles and the kernel can write each segment
    to its own output array (no post-kernel slicing of a fused buffer).
    This runs once at init: no per-forward HBM pad/cast pass over the weights.
    """
    D = weights[0].shape[0]
    tk = min(_round_up(D, 128), tk_max)          # lane-aligned K tile
    Dp = _round_up(D, tk)
    max_n = max(w.shape[1] for w in weights)
    tn = min(_round_up(max_n, 128), tn_max)      # lane-dense output stores
    seg_n, w_parts, b_parts, seg_blocks = [], [], [], []
    for w, b in zip(weights, biases):
        n = w.shape[1]
        npad = _round_up(n, tn)
        seg_n.append(n)
        seg_blocks.append(npad // tn)
        w_parts.append(jnp.pad(w.astype(dtype), ((0, Dp - D), (0, npad - n))))
        bvec = jnp.zeros((n,), dtype) if b is None else b.astype(dtype)
        b_parts.append(jnp.pad(bvec, (0, npad - n)))
    return {
        "wp": jnp.concatenate(w_parts, axis=1),
        "bp": jnp.concatenate(b_parts).reshape(1, -1),
        "tn": tn, "tk": tk, "D": D, "Dp": Dp,
        "seg_n": tuple(seg_n),
        "seg_blocks": tuple(seg_blocks),
    }


def _make_fused_kernel(n_out, seg_blocks, compute_dtype, out_dtype):
    """Tiled matmul kernel with K-innermost reduction and N-segmented outputs."""
    bounds = []
    lo = 0
    for nb in seg_blocks:
        bounds.append((lo, lo + nb))
        lo += nb

    def kernel(x_ref, w_ref, b_ref, *rest):
        out_refs = rest[:n_out]
        acc_ref = rest[n_out]
        j = pl.program_id(1)
        k = pl.program_id(2)

        @pl.when(k == 0)
        def _init():
            acc_ref[...] = jnp.zeros_like(acc_ref)

        # Mixed-precision cast happens here in VMEM (no extra HBM pass).
        acc_ref[...] += jnp.dot(x_ref[...].astype(compute_dtype), w_ref[...],
                                preferred_element_type=jnp.float32)

        @pl.when(k == pl.num_programs(2) - 1)
        def _finalize():
            # Bias add + downcast only once, outside the K reduction hot path.
            res = (acc_ref[...] + b_ref[...].astype(jnp.float32)
                   ).astype(out_dtype)
            if n_out == 1:
                out_refs[0][...] = res
            else:
                for o_ref, (blo, bhi) in zip(out_refs, bounds):
                    @pl.when((j >= blo) & (j < bhi))
                    def _write(o_ref=o_ref):
                        o_ref[...] = res

    return kernel


def _fused_linear(x2d, pack, *, tm_max=None):
    """outs[s] = x2d @ W_s (+ b_s) for all weight segments in one pallas_call.

    The activation streams from HBM once for all segments; each segment is a
    separate output array whose index_map clamps the fused-N grid index into
    its own block range (so nothing is sliced afterwards in the common
    tile-aligned case).
    """
    M, D = x2d.shape
    assert D == pack["D"], (D, pack["D"])
    wp, bp = pack["wp"], pack["bp"]
    tn, tk, Dp = pack["tn"], pack["tk"], pack["Dp"]
    seg_blocks, seg_n = pack["seg_blocks"], pack["seg_n"]
    n_out = len(seg_blocks)
    out_dtype = wp.dtype

    if tm_max is None:
        tm_max = 1024 if M >= 4096 else 512     # bigger M tile for prefill
    tm = min(_round_up(M, _sublane_pack(out_dtype)), tm_max)
    Mp = _round_up(M, tm)

    # Pad the activation only if it is not already tile-aligned (common
    # production case: no wrapper-side HBM pass at all).
    xp = x2d
    if (Mp, Dp) != (M, D):
        xp = jnp.pad(xp, ((0, Mp - M), (0, Dp - D)))

    total_nb = sum(seg_blocks)
    grid = (Mp // tm, total_nb, Dp // tk)

    x_spec = pl.BlockSpec((tm, tk), lambda i, j, k: (i, k))
    # Decode path: pure weight streaming -> deepen the weight pipeline.
    w_kwargs = {}
    if M <= 256 and grid[1] * grid[2] >= 8:
        w_kwargs["pipeline_mode"] = pl.Buffered(3)
    w_spec = pl.BlockSpec((tk, tn), lambda i, j, k: (k, j), **w_kwargs)
    b_spec = pl.BlockSpec((1, tn), lambda i, j, k: (0, j))

    seg_bounds = []
    lo = 0
    for nb in seg_blocks:
        seg_bounds.append((lo, nb))
        lo += nb

    def _out_map(lo, nb):
        if n_out == 1:
            return lambda i, j, k: (i, j)
        # Clamp the fused-N index into this segment's block range.  Out of
        # range, the index stays pinned on an already- (or soon-to-be-)
        # written block, so nothing stale is ever flushed to HBM.
        return lambda i, j, k: (i, jnp.clip(j - lo, 0, nb - 1))

    out_specs = [pl.BlockSpec((tm, tn), _out_map(lo, nb))
                 for lo, nb in seg_bounds]
    out_shape = tuple(jax.ShapeDtypeStruct((Mp, nb * tn), out_dtype)
                      for _, nb in seg_bounds)

    # The fused-N axis must stay "arbitrary" when there are multiple outputs
    # (clamped index maps are not safe to split across TensorCores).
    # TODO(synk): for decode on v7x, ensure >=2 tiles on a parallel axis so
    # both TensorCores get work.
    dim_sem = ("parallel", "parallel" if n_out == 1 else "arbitrary",
               "arbitrary")

    x_bytes = xp.size * jnp.dtype(xp.dtype).itemsize
    w_bytes = wp.size * jnp.dtype(wp.dtype).itemsize
    o_bytes = sum(Mp * nb * tn for _, nb in seg_bounds) \
        * jnp.dtype(out_dtype).itemsize
    cost = pl.CostEstimate(flops=2 * Mp * (total_nb * tn) * Dp,
                           transcendentals=0,
                           bytes_accessed=x_bytes + w_bytes + o_bytes)

    kernel = _make_fused_kernel(n_out, seg_blocks, out_dtype, out_dtype)

    outs = pl.pallas_call(
        kernel,
        out_shape=out_shape,
        grid_spec=pltpu.PrefetchScalarGridSpec(
            num_scalar_prefetch=0,
            grid=grid,
            in_specs=[x_spec, w_spec, b_spec],
            out_specs=out_specs,
            scratch_shapes=[pltpu.VMEM((tm, tn), jnp.float32)]),
        compiler_params=pltpu.CompilerParams(
            dimension_semantics=dim_sem,
            vmem_limit_bytes=40 * 1024 * 1024),
        cost_estimate=cost,
    )(xp, wp, bp)

    results = []
    for o, n in zip(outs, seg_n):
        if o.shape[0] != M or o.shape[1] != n:
            o = o[:M, :n]        # only when padding was needed (small shapes)
        results.append(o)
    return tuple(results)


class UnfusedQKVPallas:
    """JAX/Pallas port of the fms QKV (unfused) module."""

    def __init__(self, emb_dim, nheads, kvheads, emb_kq_per_head,
                 emb_v_per_head, use_bias, dtype=jnp.float32, seed=0):
        self.emb_dim = emb_dim
        self.nheads = nheads
        self.kvheads = kvheads
        self.emb_kq_per_head = emb_kq_per_head
        self.emb_v_per_head = emb_v_per_head
        self.use_bias = use_bias
        self.dtype = dtype
        self.reset_parameters(seed)

    def reset_parameters(self, seed=0):
        # Deterministic synthetic init (stand-in for trunc_normal_ in fms).
        key = jax.random.PRNGKey(seed)
        kq, kk, kv, kbq, kbk, kbv = jax.random.split(key, 6)
        d = self.emb_dim
        nq = self.nheads * self.emb_kq_per_head
        nk = self.kvheads * self.emb_kq_per_head
        nv = self.kvheads * self.emb_v_per_head
        std = 0.02
        self.wq = (std * jax.random.normal(kq, (d, nq))).astype(self.dtype)
        self.wk = (std * jax.random.normal(kk, (d, nk))).astype(self.dtype)
        self.wv = (std * jax.random.normal(kv, (d, nv))).astype(self.dtype)
        if self.use_bias:
            self.bq = (std * jax.random.normal(kbq, (nq,))).astype(self.dtype)
            self.bk = (std * jax.random.normal(kbk, (nk,))).astype(self.dtype)
            self.bv = (std * jax.random.normal(kbv, (nv,))).astype(self.dtype)
        else:
            self.bq = self.bk = self.bv = None

        # Pre-padded / pre-cast parameter packs (one-time cost; avoids a full
        # HBM pad/cast pass over the weights on every forward).
        # TODO(synk): in production, build only the packs needed for the
        # attention pattern actually used (these duplicate the weights in HBM).
        self._pack_qkv = _make_pack([self.wq, self.wk, self.wv],
                                    [self.bq, self.bk, self.bv], self.dtype)
        self._pack_kv = _make_pack([self.wk, self.wv],
                                   [self.bk, self.bv], self.dtype)
        self._pack_q = _make_pack([self.wq], [self.bq], self.dtype)
        self._pack_k = _make_pack([self.wk], [self.bk], self.dtype)
        self._pack_v = _make_pack([self.wv], [self.bv], self.dtype)

    def __call__(self, q, k=None, v=None):
        # Mirror fms UnfusedQKV.forward: self-attention if k/v are None.
        if k is None and v is None:
            k = q
            v = q
        elif k is None or v is None:
            raise ValueError("both k and v must be provided, or neither")

        B, S, D = q.shape

        # NOTE: the fused fast paths key on Python object identity; value-equal
        # but distinct arrays fall back to separate projections (still correct).
        if (q is k) and (q is v):
            # Self-attention: single pallas_call, activation streamed once,
            # three separate Q/K/V outputs (no post-kernel slicing pass).
            qo, ko, vo = _fused_linear(q.reshape(B * S, D), self._pack_qkv)
            return (qo.reshape(B, S, -1), ko.reshape(B, S, -1),
                    vo.reshape(B, S, -1))

        if (k is v) and (k is not q):
            # Cross-attention with shared encoder output: fuse K and V.
            (qo,) = _fused_linear(q.reshape(B * S, D), self._pack_q)
            Bk, Sk, Dk = k.shape
            ko, vo = _fused_linear(k.reshape(Bk * Sk, Dk), self._pack_kv)
            return (qo.reshape(B, S, -1), ko.reshape(Bk, Sk, -1),
                    vo.reshape(Bk, Sk, -1))

        # Fully distinct q/k/v inputs: three tiled projections.
        (qo,) = _fused_linear(q.reshape(B * S, D), self._pack_q)
        Bk, Sk, Dk = k.shape
        (ko,) = _fused_linear(k.reshape(Bk * Sk, Dk), self._pack_k)
        Bv, Sv, Dv = v.shape
        (vo,) = _fused_linear(v.reshape(Bv * Sv, Dv), self._pack_v)
        return (qo.reshape(B, S, -1), ko.reshape(Bk, Sk, -1),
                vo.reshape(Bv, Sv, -1))


if __name__ == "__main__":
    # Small shapes consistent with the module's constructor args.
    batch, seq = 2, 8
    emb_dim = 32
    nheads, kvheads = 4, 2
    emb_kq_per_head, emb_v_per_head = 8, 8
    use_bias = True

    nq = nheads * emb_kq_per_head
    nk = kvheads * emb_kq_per_head
    nv = kvheads * emb_v_per_head
    hp = jax.lax.Precision.HIGHEST  # exact references (TPU f32 matmul may use
                                    # bf16-pass decomposition at default prec.)

    module = UnfusedQKVPallas(emb_dim, nheads, kvheads, emb_kq_per_head,
                              emb_v_per_head, use_bias, dtype=jnp.float32,
                              seed=0)

    key = jax.random.PRNGKey(0)
    kx, kk_in, kv_in = jax.random.split(key, 3)
    x = jax.random.normal(kx, (batch, seq, emb_dim), dtype=jnp.float32)
    x2d = x.reshape(-1, emb_dim)

    # --- Self-attention (fully fused QKV, three outputs) ---
    q_out, k_out, v_out = module(x)
    jax.block_until_ready((q_out, k_out, v_out))
    q_ref = (jnp.matmul(x2d, module.wq, precision=hp) + module.bq).reshape(q_out.shape)
    k_ref = (jnp.matmul(x2d, module.wk, precision=hp) + module.bk).reshape(k_out.shape)
    v_ref = (jnp.matmul(x2d, module.wv, precision=hp) + module.bv).reshape(v_out.shape)
    assert q_out.shape == (batch, seq, nq)
    assert k_out.shape == (batch, seq, nk)
    assert v_out.shape == (batch, seq, nv)
    assert jnp.allclose(q_out, q_ref, atol=3e-3), float(jnp.max(jnp.abs(q_out - q_ref)))
    assert jnp.allclose(k_out, k_ref, atol=3e-3), float(jnp.max(jnp.abs(k_out - k_ref)))
    assert jnp.allclose(v_out, v_ref, atol=3e-3), float(jnp.max(jnp.abs(v_out - v_ref)))

    # --- Cross-attention with distinct k, v inputs (3 projections) ---
    k_in = jax.random.normal(kk_in, (batch, seq, emb_dim), dtype=jnp.float32)
    v_in = jax.random.normal(kv_in, (batch, seq, emb_dim), dtype=jnp.float32)
    q2, k2, v2 = module(x, k_in, v_in)
    jax.block_until_ready((q2, k2, v2))
    q2_ref = (jnp.matmul(x2d, module.wq, precision=hp) + module.bq).reshape(q2.shape)
    k2_ref = (jnp.matmul(k_in.reshape(-1, emb_dim), module.wk, precision=hp)
              + module.bk).reshape(k2.shape)
    v2_ref = (jnp.matmul(v_in.reshape(-1, emb_dim), module.wv, precision=hp)
              + module.bv).reshape(v2.shape)
    assert jnp.allclose(q2, q2_ref, atol=3e-3)
    assert jnp.allclose(k2, k2_ref, atol=3e-3)
    assert jnp.allclose(v2, v2_ref, atol=3e-3)

    # --- Cross-attention with shared encoder output (k is v): fused KV ---
    enc = jax.random.normal(jax.random.PRNGKey(7), (batch, seq, emb_dim),
                            dtype=jnp.float32)
    q3, k3, v3 = module(x, enc, enc)
    jax.block_until_ready((q3, k3, v3))
    enc2d = enc.reshape(-1, emb_dim)
    k3_ref = (jnp.matmul(enc2d, module.wk, precision=hp) + module.bk).reshape(k3.shape)
    v3_ref = (jnp.matmul(enc2d, module.wv, precision=hp) + module.bv).reshape(v3.shape)
    assert jnp.allclose(q3, q_ref, atol=3e-3)
    assert jnp.allclose(k3, k3_ref, atol=3e-3)
    assert jnp.allclose(v3, v3_ref, atol=3e-3)

    # --- bf16 weights (recommended production config), f32 accumulation ---
    module_bf16 = UnfusedQKVPallas(emb_dim, nheads, kvheads, emb_kq_per_head,
                                   emb_v_per_head, use_bias,
                                   dtype=jnp.bfloat16, seed=0)
    qb, kb, vb = module_bf16(x)
    jax.block_until_ready((qb, kb, vb))
    qb_ref = (jnp.matmul(x2d, module_bf16.wq.astype(jnp.float32), precision=hp)
              + module_bf16.bq.astype(jnp.float32)).reshape(qb.shape)
    assert jnp.allclose(qb.astype(jnp.float32), qb_ref, atol=2e-2)

    print("KERNEL_OK")
</pallas_src>

<mosaic_0001>
module attributes {stable_mosaic.version = 11 : i64} {
  func.func @kernel(%arg0: i32, %arg1: i32, %arg2: i32, %arg3: memref<16x128xf32, #tpu.memory_space<vmem>>, %arg4: memref<128x128xf32, #tpu.memory_space<vmem>>, %arg5: memref<1x128xf32, #tpu.memory_space<vmem>>, %arg6: memref<16x128xf32, #tpu.memory_space<vmem>>, %arg7: memref<16x128xf32, #tpu.memory_space<vmem>>, %arg8: memref<16x128xf32, #tpu.memory_space<vmem>>, %arg9: memref<16x128xf32, #tpu.memory_space<vmem>>) attributes {dimension_semantics = [#tpu.dimension_semantics<parallel>, #tpu.dimension_semantics<arbitrary>, #tpu.dimension_semantics<arbitrary>], iteration_bounds = array<i64: 1, 3, 1>, scalar_prefetch = 0 : i64, scratch_operands = 1 : i64, tpu.core_type = #tpu.core_type<tc>, window_params = [{transform_indices = @transform_0, window_bounds = array<i64: 16, 128>}, {transform_indices = @transform_1, window_bounds = array<i64: 128, 128>}, {transform_indices = @transform_2, window_bounds = array<i64: 1, 128>}, {transform_indices = @transform_3, window_bounds = array<i64: 16, 128>}, {transform_indices = @transform_4, window_bounds = array<i64: 16, 128>}, {transform_indices = @transform_5, window_bounds = array<i64: 16, 128>}]} {
    %c0_i32 = arith.constant 0 : i32
    %0 = arith.cmpi eq, %arg2, %c0_i32 : i32
    %1 = arith.extui %0 : i1 to i32
    %c0_i32_0 = arith.constant 0 : i32
    %2 = arith.cmpi ne, %1, %c0_i32_0 : i32
    scf.if %2 {
      %cst_10 = arith.constant 0.000000e+00 : f32
      %12 = vector.broadcast %cst_10 : f32 to vector<16x128xf32>
      %c0_11 = arith.constant 0 : index
      %c0_12 = arith.constant 0 : index
      %13 = vector.load %arg9[%c0_11, %c0_12] : memref<16x128xf32, #tpu.memory_space<vmem>>, vector<16x128xf32>
      tpu.vector_store %arg9[%c0_11, %c0_12], %12 {strides = array<i32>} : memref<16x128xf32, #tpu.memory_space<vmem>>, vector<16x128xf32>,
    } else {
    }
    %c0 = arith.constant 0 : index
    %c0_1 = arith.constant 0 : index
    %3 = vector.load %arg9[%c0, %c0_1] : memref<16x128xf32, #tpu.memory_space<vmem>>, vector<16x128xf32>
    %c0_2 = arith.constant 0 : index
    %c0_3 = arith.constant 0 : index
    %4 = vector.load %arg3[%c0_2, %c0_3] : memref<16x128xf32, #tpu.memory_space<vmem>>, vector<16x128xf32>
    %c0_4 = arith.constant 0 : index
    %c0_5 = arith.constant 0 : index
    %5 = vector.load %arg4[%c0_4, %c0_5] : memref<128x128xf32, #tpu.memory_space<vmem>>, vector<128x128xf32>
    %cst = arith.constant dense<0.000000e+00> : vector<16x128xf32>
    %6 = tpu.matmul %4, %5, %cst {dimension_numbers = #tpu.dot_dimension_numbers<[1], [0], [0], [1], [0, 0, 1, 1], [], []>} : vector<16x128xf32>, vector<128x128xf32>, vector<16x128xf32> -> vector<16x128xf32>
    %7 = arith.addf %3, %6 : vector<16x128xf32>
    %c0_6 = arith.constant 0 : index
    %c0_7 = arith.constant 0 : index
    %8 = vector.load %arg9[%c0_6, %c0_7] : memref<16x128xf32, #tpu.memory_space<vmem>>, vector<16x128xf32>
    tpu.vector_store %arg9[%c0_6, %c0_7], %7 {strides = array<i32>} : memref<16x128xf32, #tpu.memory_space<vmem>>, vector<16x128xf32>,
    %c0_i32_8 = arith.constant 0 : i32
    %9 = arith.cmpi eq, %arg2, %c0_i32_8 : i32
    %10 = arith.extui %9 : i1 to i32
    %c0_i32_9 = arith.constant 0 : i32
    %11 = arith.cmpi ne, %10, %c0_i32_9 : i32
    scf.if %11 {
      %c0_10 = arith.constant 0 : index
      %c0_11 = arith.constant 0 : index
      %12 = vector.load %arg9[%c0_10, %c0_11] : memref<16x128xf32, #tpu.memory_space<vmem>>, vector<16x128xf32>
      %c0_12 = arith.constant 0 : index
      %c0_13 = arith.constant 0 : index
      %13 = vector.load %arg5[%c0_12, %c0_13] : memref<1x128xf32, #tpu.memory_space<vmem>>, vector<1x128xf32>
      %14 = vector.broadcast %13 : vector<1x128xf32> to vector<16x128xf32>
      %15 = arith.addf %12, %14 : vector<16x128xf32>
      %c0_i32_14 = arith.constant 0 : i32
      %16 = arith.cmpi sge, %arg1, %c0_i32_14 : i32
      %c1_i32 = arith.constant 1 : i32
      %17 = arith.cmpi slt, %arg1, %c1_i32 : i32
      %18 = arith.andi %16, %17 : i1
      %19 = arith.extui %18 : i1 to i32
      %c0_i32_15 = arith.constant 0 : i32
      %20 = arith.cmpi ne, %19, %c0_i32_15 : i32
      scf.if %20 {
        %c0_20 = arith.constant 0 : index
        %c0_21 = arith.constant 0 : index
        %31 = vector.load %arg6[%c0_20, %c0_21] : memref<16x128xf32, #tpu.memory_space<vmem>>, vector<16x128xf32>
        tpu.vector_store %arg6[%c0_20, %c0_21], %15 {strides = array<i32>} : memref<16x128xf32, #tpu.memory_space<vmem>>, vector<16x128xf32>,
      } else {
      }
      %c1_i32_16 = arith.constant 1 : i32
      %21 = arith.cmpi sge, %arg1, %c1_i32_16 : i32
      %c2_i32 = arith.constant 2 : i32
      %22 = arith.cmpi slt, %arg1, %c2_i32 : i32
      %23 = arith.andi %21, %22 : i1
      %24 = arith.extui %23 : i1 to i32
      %c0_i32_17 = arith.constant 0 : i32
      %25 = arith.cmpi ne, %24, %c0_i32_17 : i32
      scf.if %25 {
        %c0_20 = arith.constant 0 : index
        %c0_21 = arith.constant 0 : index
        %31 = vector.load %arg7[%c0_20, %c0_21] : memref<16x128xf32, #tpu.memory_space<vmem>>, vector<16x128xf32>
        tpu.vector_store %arg7[%c0_20, %c0_21], %15 {strides = array<i32>} : memref<16x128xf32, #tpu.memory_space<vmem>>, vector<16x128xf32>,
      } else {
      }
      %c2_i32_18 = arith.constant 2 : i32
      %26 = arith.cmpi sge, %arg1, %c2_i32_18 : i32
      %c3_i32 = arith.constant 3 : i32
      %27 = arith.cmpi slt, %arg1, %c3_i32 : i32
      %28 = arith.andi %26, %27 : i1
      %29 = arith.extui %28 : i1 to i32
      %c0_i32_19 = arith.constant 0 : i32
      %30 = arith.cmpi ne, %29, %c0_i32_19 : i32
      scf.if %30 {
        %c0_20 = arith.constant 0 : index
        %c0_21 = arith.constant 0 : index
        %31 = vector.load %arg8[%c0_20, %c0_21] : memref<16x128xf32, #tpu.memory_space<vmem>>, vector<16x128xf32>
        tpu.vector_store %arg8[%c0_20, %c0_21], %15 {strides = array<i32>} : memref<16x128xf32, #tpu.memory_space<vmem>>, vector<16x128xf32>,
      } else {
      }
    } else {
    }
    return
  }
  func.func @transform_0(%arg0: i32, %arg1: i32, %arg2: i32) -> (i32, i32) {
    %c0_i32 = arith.constant 0 : i32
    return %arg0, %arg2 : i32, i32
  }
  func.func @transform_1(%arg0: i32, %arg1: i32, %arg2: i32) -> (i32, i32) {
    %c0_i32 = arith.constant 0 : i32
    return %arg2, %arg1 : i32, i32
  }
  func.func @transform_2(%arg0: i32, %arg1: i32, %arg2: i32) -> (i32, i32) {
    %c0_i32 = arith.constant 0 : i32
    %c0_i32_0 = arith.constant 0 : i32
    return %c0_i32, %arg1 : i32, i32
  }
  func.func @transform_3(%arg0: i32, %arg1: i32, %arg2: i32) -> (i32, i32) {
    %c0_i32 = arith.constant 0 : i32
    %0 = arith.subi %arg1, %c0_i32 : i32
    %c0_i32_0 = arith.constant 0 : i32
    %c0_i32_1 = arith.constant 0 : i32
    %1 = arith.maxsi %c0_i32_0, %0 : i32
    %2 = arith.minsi %c0_i32_1, %1 : i32
    %c0_i32_2 = arith.constant 0 : i32
    return %arg0, %2 : i32, i32
  }
  func.func @transform_4(%arg0: i32, %arg1: i32, %arg2: i32) -> (i32, i32) {
    %c1_i32 = arith.constant 1 : i32
    %0 = arith.subi %arg1, %c1_i32 : i32
    %c0_i32 = arith.constant 0 : i32
    %c0_i32_0 = arith.constant 0 : i32
    %1 = arith.maxsi %c0_i32, %0 : i32
    %2 = arith.minsi %c0_i32_0, %1 : i32
    %c0_i32_1 = arith.constant 0 : i32
    return %arg0, %2 : i32, i32
  }
  func.func @transform_5(%arg0: i32, %arg1: i32, %arg2: i32) -> (i32, i32) {
    %c2_i32 = arith.constant 2 : i32
    %0 = arith.subi %arg1, %c2_i32 : i32
    %c0_i32 = arith.constant 0 : i32
    %c0_i32_0 = arith.constant 0 : i32
    %1 = arith.maxsi %c0_i32, %0 : i32
    %2 = arith.minsi %c0_i32_0, %1 : i32
    %c0_i32_1 = arith.constant 0 : i32
    return %arg0, %2 : i32, i32
  }
}

</mosaic_0001>

<llo_original>
// kernel: tpu_custom_call.1
$region0: #{tpu_custom_call.1}
  #allocation0 [shape = 'u32[]', space=smem, size = 0x4, offset = 0x4, fixed_abs, tag = 'smem constant byte address 0x4 - core index']
  #allocation1 [shape = 'u32[72,128]{1,0:T(1,128)}', space=vmem, size = 0x9000, scoped, tag = 'internal scratch']
  #allocation2 [shape = 'f32[16,128]{1,0:T(8,128)}', space=vmem, size = 0x2000, scoped, tag = 'scratch operand']
  %s0 = inlined_call_operand.hbm [shape: f32[16,128], index: 0, kind: input, shape index: {}]
  %s1 = inlined_call_operand.hbm [shape: f32[128,384], index: 1, kind: input, shape index: {}]
  %s2 = inlined_call_operand.hbm [shape: f32[1,384], index: 2, kind: input, shape index: {}]
  %s3 = inlined_call_operand.hbm [shape: f32[16,128], index: 3, kind: output, shape index: {0}]
  %s4 = inlined_call_operand.hbm [shape: f32[16,128], index: 4, kind: output, shape index: {1}]
  %s5 = inlined_call_operand.hbm [shape: f32[16,128], index: 5, kind: output, shape index: {2}]
  %6 = xla_tuple %s3, %s4, %s5
  %s7 = sld [smem:[#allocation0]]
  $region93: #{tpu_custom_call.1} parent=0
    _
  %s9 = ssub.s32 1, %s7
  %s10 = scalar_select 0, %s9, %s7
  $region1: #{tpu_custom_call.1} parent=0
    #allocation3 [shape = 'u8[8192]{0}', space=vmem, size = 0x2000, scoped, tag = 'input window, operand 0, single buffered']
    #allocation4 [shape = 's32[2]{0}', space=sflag, size = 0x8, scoped, tag = 'scoped memory for tpu_custom_call.1']
    #allocation5 [shape = 's32[2]{0}', space=sflag, size = 0x8, scoped, tag = 'scoped memory for tpu_custom_call.1']
    #allocation6 [shape = 'u8[131072]{0}', space=vmem, size = 0x20000, scoped, tag = 'input window, operand 1']
    #allocation7 [shape = 's32[2]{0}', space=sflag, size = 0x8, scoped, tag = 'scoped memory for tpu_custom_call.1']
    #allocation8 [shape = 'u8[1024]{0}', space=vmem, size = 0x400, scoped, tag = 'input window, operand 2']
    #allocation9 [shape = 'u8[16384]{0}', space=vmem, size = 0x4000, scoped, tag = 'output window, operand 0']
    #allocation10 [shape = 'u8[16384]{0}', space=vmem, size = 0x4000, scoped, tag = 'output window, operand 1']
    #allocation11 [shape = 's32[2]{0}', space=sflag, size = 0x8, scoped, tag = 'scoped memory for tpu_custom_call.1']
    #allocation12 [shape = 'u8[16384]{0}', space=vmem, size = 0x4000, scoped, tag = 'output window, operand 2']
    %11 = vsyncpa [#allocation4], 0
    %12 = vsyncpa [#allocation7], 0
    %s13 = scalar_lea.sflag [#allocation7], 1
    %14 = vsyncpa %s13, 0
    %15 = vsyncpa [#allocation5], 0
    %s16 = scalar_lea.sflag [#allocation5], 1
    %17 = vsyncpa %s16, 0
    %18 = vsyncpa [#allocation11], 0
    %s19 = scalar_lea.sflag [#allocation11], 1
    %20 = vsyncpa %s19, 0
    loop: start=0, step=1, limit=5
    $region2: #{tpu_custom_call.1} parent=1 // loop_pre_header
      _
    $region3: #{tpu_custom_call.1} parent=1 // loop_header
      %s22 = sphi 0, %s26
      %p23 = scmp.ge.s32.totalorder %s22, 5
      %s29 = sphi 0, %s48
      %s30 = sphi 0, %s44
      %s31 = sphi 0, %s40
      %s32 = sphi 0, %s29
      %s33 = sphi 0, %s30
      %s34 = sphi 0, %s31
      %s35 = sphi 0, %s32
      %s36 = sphi 0, %s33
      %s37 = sphi 0, %s34
      %s53 = sphi 0, %s55
      %s56 = sphi 0, %s53
      %s57 = sphi 0, %s56
      %s73 = sphi 0, %s57
      %s81 = sphi 0, %s83
      %s84 = sphi 0, %s81
      %s85 = sphi 0, %s84
      %s101 = sphi 0, %s85
      %s107 = sphi 0, %s109
      %s110 = sphi 0, %s107
      %s111 = sphi 0, %s110
      %s127 = sphi 0, %s111
      %s143 = sphi 0, %s145
      %s146 = sphi 0, %s143
      %s147 = sphi 0, %s146
      %s163 = sphi 0, %s147
      %s181 = sphi 0, %s183
      %s184 = sphi 0, %s181
      %s185 = sphi 0, %s184
      %s201 = sphi 0, %s185
      %s219 = sphi 0, %s221
      %s222 = sphi 0, %s219
      %s223 = sphi 0, %s222
      %s239 = sphi 0, %s223
    $region4: #{tpu_custom_call.1} parent=1 // loop_header_branch
      %25 = sbr.rel (%p23) target = $region8
    $region5: #{tpu_custom_call.1} parent=1 // loop_body
      %s27 = ssub.s32 %s22, 1
      %s28 = ssub.s32 %s22, 2
      %s38 = sadd.s32 1, %s31
      %p39 = scmp.ge.s32.totalorder %s38, 1
      %s40 = scalar_select %p39, 0, %s38
      %s41 = sadd.s32 1, %s30
      %s42 = scalar_select %p39, %s41, %s30
      %p43 = scmp.ge.s32.totalorder %s42, 3
      %s44 = scalar_select %p43, 0, %s42
      %s45 = sadd.s32 1, %s29
      %s46 = scalar_select %p43, %s45, %s29
      %p47 = scmp.ge.s32.totalorder %s46, 1
      %s48 = scalar_select %p47, 0, %s46
      %s49 = ssub.s32 %s29, %s48
      %s50 = ssub.s32 %s31, %s40
      %s51 = sor.u32 %s49, %s50
      %p52 = scmp.eq.s32.totalorder %s51, 0
      %s54 = sadd.s32 %s53, 1
      %s55 = scalar_select %p52, %s53, %s54
      %p58 = pneg %p52
      %p59 = scmp.eq.s32.totalorder %s22, 2
      %p60 = por %p58, %p59
      %p61 = scmp.ne.s32.totalorder %s53, %s56
      %p62 = scmp.eq.s32.totalorder %s22, 0
      %p63 = por %p61, %p62
      %p64 = scmp.ne.s32.totalorder %s53, %s56
      %p65 = scmp.eq.s32.totalorder %s27, 2
      %p66 = por %p64, %p65
      %p67 = scmp.ne.s32.totalorder %s56, %s57
      %p68 = scmp.eq.s32.totalorder %s27, 0
      %p69 = por %p67, %p68
      %p70 = scmp.ne.s32.totalorder %s56, %s57
      %p71 = scmp.eq.s32.totalorder %s28, 2
      %p72 = por %p70, %p71
      %p74 = scmp.ne.s32.totalorder %s57, %s73
      %p75 = scmp.eq.s32.totalorder %s28, 0
      %p76 = por %p74, %p75
      %s77 = ssub.s32 %s31, %s40
      %s78 = ssub.s32 %s30, %s44
      %s79 = sor.u32 %s77, %s78
      %p80 = scmp.eq.s32.totalorder %s79, 0
      %s82 = sadd.s32 %s81, 1
      %s83 = scalar_select %p80, %s81, %s82
      %p86 = pneg %p80
      %p87 = scmp.eq.s32.totalorder %s22, 2
      %p88 = por %p86, %p87
      %p89 = scmp.ne.s32.totalorder %s81, %s84
      %p90 = scmp.eq.s32.totalorder %s22, 0
      %p91 = por %p89, %p90
      %p92 = scmp.ne.s32.totalorder %s81, %s84
      %p93 = scmp.eq.s32.totalorder %s27, 2
      %p94 = por %p92, %p93
      %p95 = scmp.ne.s32.totalorder %s84, %s85
      %p96 = scmp.eq.s32.totalorder %s27, 0
      %p97 = por %p95, %p96
      %p98 = scmp.ne.s32.totalorder %s84, %s85
      %p99 = scmp.eq.s32.totalorder %s28, 2
      %p100 = por %p98, %p99
      %p102 = scmp.ne.s32.totalorder %s85, %s101
      %p103 = scmp.eq.s32.totalorder %s28, 0
      %p104 = por %p102, %p103
      %s105 = ssub.s32 %s30, %s44
      %p106 = scmp.eq.s32.totalorder %s105, 0
      %s108 = sadd.s32 %s107, 1
      %s109 = scalar_select %p106, %s107, %s108
      %p112 = pneg %p106
      %p113 = scmp.eq.s32.totalorder %s22, 2
      %p114 = por %p112, %p113
      %p115 = scmp.ne.s32.totalorder %s107, %s110
      %p116 = scmp.eq.s32.totalorder %s22, 0
      %p117 = por %p115, %p116
      %p118 = scmp.ne.s32.totalorder %s107, %s110
      %p119 = scmp.eq.s32.totalorder %s27, 2
      %p120 = por %p118, %p119
      %p121 = scmp.ne.s32.totalorder %s110, %s111
      %p122 = scmp.eq.s32.totalorder %s27, 0
      %p123 = por %p121, %p122
      %p124 = scmp.ne.s32.totalorder %s110, %s111
      %p125 = scmp.eq.s32.totalorder %s28, 2
      %p126 = por %p124, %p125
      %p128 = scmp.ne.s32.totalorder %s111, %s127
      %p129 = scmp.eq.s32.totalorder %s28, 0
      %p130 = por %p128, %p129
      %p131 = scmp.gt.s32.totalorder %s30, 0
      %s132 = scalar_select %p131, %s30, 0
      %p133 = scmp.lt.s32.totalorder %s132, 0
      %s134 = scalar_select %p133, %s132, 0
      %p135 = scmp.gt.s32.totalorder %s44, 0
      %s136 = scalar_select %p135, %s44, 0
      %p137 = scmp.lt.s32.totalorder %s136, 0
      %s138 = scalar_select %p137, %s136, 0
      %s139 = ssub.s32 %s29, %s48
      %s140 = ssub.s32 %s134, %s138
      %s141 = sor.u32 %s139, %s140
      %p142 = scmp.eq.s32.totalorder %s141, 0
      %s144 = sadd.s32 %s143, 1
      %s145 = scalar_select %p142, %s143, %s144
      %p148 = pneg %p142
      %p149 = scmp.eq.s32.totalorder %s22, 2
      %p150 = por %p148, %p149
      %p151 = scmp.ne.s32.totalorder %s143, %s146
      %p152 = scmp.eq.s32.totalorder %s22, 0
      %p153 = por %p151, %p152
      %p154 = scmp.ne.s32.totalorder %s143, %s146
      %p155 = scmp.eq.s32.totalorder %s27, 2
      %p156 = por %p154, %p155
      %p157 = scmp.ne.s32.totalorder %s146, %s147
      %p158 = scmp.eq.s32.totalorder %s27, 0
      %p159 = por %p157, %p158
      %p160 = scmp.ne.s32.totalorder %s146, %s147
      %p161 = scmp.eq.s32.totalorder %s28, 2
      %p162 = por %p160, %p161
      %p164 = scmp.ne.s32.totalorder %s147, %s163
      %p165 = scmp.eq.s32.totalorder %s28, 0
      %p166 = por %p164, %p165
      %s167 = ssub.s32 %s30, 1
      %p168 = scmp.gt.s32.totalorder %s167, 0
      %s169 = scalar_select %p168, %s167, 0
      %p170 = scmp.lt.s32.totalorder %s169, 0
      %s171 = scalar_select %p170, %s169, 0
      %s172 = ssub.s32 %s44, 1
      %p173 = scmp.gt.s32.totalorder %s172, 0
      %s174 = scalar_select %p173, %s172, 0
      %p175 = scmp.lt.s32.totalorder %s174, 0
      %s176 = scalar_select %p175, %s174, 0
      %s177 = ssub.s32 %s29, %s48
      %s178 = ssub.s32 %s171, %s176
      %s179 = sor.u32 %s177, %s178
      %p180 = scmp.eq.s32.totalorder %s179, 0
      %s182 = sadd.s32 %s181, 1
      %s183 = scalar_select %p180, %s181, %s182
      %p186 = pneg %p180
      %p187 = scmp.eq.s32.totalorder %s22, 2
      %p188 = por %p186, %p187
      %p189 = scmp.ne.s32.totalorder %s181, %s184
      %p190 = scmp.eq.s32.totalorder %s22, 0
      %p191 = por %p189, %p190
      %p192 = scmp.ne.s32.totalorder %s181, %s184
      %p193 = scmp.eq.s32.totalorder %s27, 2
      %p194 = por %p192, %p193
      %p195 = scmp.ne.s32.totalorder %s184, %s185
      %p196 = scmp.eq.s32.totalorder %s27, 0
      %p197 = por %p195, %p196
      %p198 = scmp.ne.s32.totalorder %s184, %s185
      %p199 = scmp.eq.s32.totalorder %s28, 2
      %p200 = por %p198, %p199
      %p202 = scmp.ne.s32.totalorder %s185, %s201
      %p203 = scmp.eq.s32.totalorder %s28, 0
      %p204 = por %p202, %p203
      %s205 = ssub.s32 %s30, 2
      %p206 = scmp.gt.s32.totalorder %s205, 0
      %s207 = scalar_select %p206, %s205, 0
      %p208 = scmp.lt.s32.totalorder %s207, 0
      %s209 = scalar_select %p208, %s207, 0
      %s210 = ssub.s32 %s44, 2
      %p211 = scmp.gt.s32.totalorder %s210, 0
      %s212 = scalar_select %p211, %s210, 0
      %p213 = scmp.lt.s32.totalorder %s212, 0
      %s214 = scalar_select %p213, %s212, 0
      %s215 = ssub.s32 %s29, %s48
      %s216 = ssub.s32 %s209, %s214
      %s217 = sor.u32 %s215, %s216
      %p218 = scmp.eq.s32.totalorder %s217, 0
      %s220 = sadd.s32 %s219, 1
      %s221 = scalar_select %p218, %s219, %s220
      %p224 = pneg %p218
      %p225 = scmp.eq.s32.totalorder %s22, 2
      %p226 = por %p224, %p225
      %p227 = scmp.ne.s32.totalorder %s219, %s222
      %p228 = scmp.eq.s32.totalorder %s22, 0
      %p229 = por %p227, %p228
      %p230 = scmp.ne.s32.totalorder %s219, %s222
      %p231 = scmp.eq.s32.totalorder %s27, 2
      %p232 = por %p230, %p231
      %p233 = scmp.ne.s32.totalorder %s222, %s223
      %p234 = scmp.eq.s32.totalorder %s27, 0
      %p235 = por %p233, %p234
      %p236 = scmp.ne.s32.totalorder %s222, %s223
      %p237 = scmp.eq.s32.totalorder %s28, 2
      %p238 = por %p236, %p237
      %p240 = scmp.ne.s32.totalorder %s223, %s239
      %p241 = scmp.eq.s32.totalorder %s28, 0
      %p242 = por %p240, %p241
      %p243 = scmp.le.s32.totalorder 1, %s22
      %p244 = scmp.lt.s32.totalorder %s22, 4
      %p245 = pnand %p243, %p244
      %p246 = pneg %p245
      // Predicated region
      $region9: #{tpu_custom_call.1} parent=5 // pred_check
        _
      $region10: #{tpu_custom_call.1} parent=5 // pred_check_branch
        %248 = sbr.rel (%p245) target = $region12
      $region11: #{tpu_custom_call.1} parent=5 // pred_region
        %s249 = ssub.s32 %s22, 1
        // Predicated region
        $region13: #{tpu_custom_call.1} parent=11 // pred_check
          %p250 = pneg %p69
        $region14: #{tpu_custom_call.1} parent=11 // pred_check_branch
          %252 = sbr.rel (%p250) target = $region16
        $region15: #{tpu_custom_call.1} parent=11 // pred_region
          %s253 = smul.u32 2, %s32
          %255 = vsyncadd [#allocation4], 0
          %s256 = sadd.s32 %s34, %s253
          %s257 = smul.addr %s256, 8
          %s258 = scalar_lea.hbm %s0, %s257
          %s259 = sshll.u32 %s258, 4
          %s260 = int_to_ptr.hbm [resolvable:$true] %s259
          %s261 = sshll.u32 [#allocation3], 4
          %s262 = int_to_ptr.vmem [resolvable:$true] %s261
          %267 = dma.hbm_to_vmem [thread:$0]  %s260, 256, %s262, [#allocation4], 128, 128, 8
        $region16: #{tpu_custom_call.1} parent=11 // pred_fallthru
          _
      $region12: #{tpu_custom_call.1} parent=5 // pred_fallthru
        _
      %p268 = scmp.lt.s32.totalorder %s22, 3
      // Predicated region
      $region17: #{tpu_custom_call.1} parent=5 // pred_check
        %p269 = pneg %p268
      $region18: #{tpu_custom_call.1} parent=5 // pred_check_branch
        %271 = sbr.rel (%p269) target = $region20
      $region19: #{tpu_custom_call.1} parent=5 // pred_region
        // Predicated region
        $region21: #{tpu_custom_call.1} parent=19 // pred_check
          %p272 = pneg %p91
        $region22: #{tpu_custom_call.1} parent=19 // pred_check_branch
          %274 = sbr.rel (%p272) target = $region24
        $region23: #{tpu_custom_call.1} parent=19 // pred_region
          %s275 = sand.u32 %s22, 1
          %s276 = scalar_lea.sflag [#allocation7], %s275
          %s277 = sand.u32 %s81, 1
          %s278 = smul.addr %s277, 128
          %s279 = scalar_lea.vmem [#allocation6], %s278
          %s280 = smul.u32 16, %s31
          %282 = vsyncadd %s276, 0
          %s283 = smul.addr %s280, 3
          %s284 = sadd.s32 %s30, %s283
          %s285 = smul.addr %s284, 8
          %s286 = scalar_lea.hbm %s1, %s285
          %s287 = sshll.u32 %s286, 4
          %s288 = int_to_ptr.hbm [resolvable:$true] %s287
          %s289 = sshll.u32 %s279, 4
          %s290 = int_to_ptr.vmem [resolvable:$true] %s289
          %295 = dma.hbm_to_vmem [thread:$0]  %s288, 2048, %s290, %s276, 384, 128, 8
        $region24: #{tpu_custom_call.1} parent=19 // pred_fallthru
          _
        // Predicated region
        $region25: #{tpu_custom_call.1} parent=19 // pred_check
          %p296 = pneg %p117
        $region26: #{tpu_custom_call.1} parent=19 // pred_check_branch
          %298 = sbr.rel (%p296) target = $region28
        $region27: #{tpu_custom_call.1} parent=19 // pred_region
          %s299 = sand.u32 %s22, 1
          %s300 = scalar_lea.sflag [#allocation7], %s299
          %s301 = sand.u32 %s107, 1
          %s302 = scalar_lea.vmem [#allocation8], %s301
          %304 = vsyncadd %s300, 0
          %s305 = scalar_lea.hbm %s2, %s30
          %s307 = sshll.u32 %s305, 4
          %s308 = int_to_ptr.hbm [resolvable:$true] %s307
          %s309 = sshll.u32 %s302, 4
          %s310 = int_to_ptr.vmem [resolvable:$true] %s309
          %312 = dma.hbm_to_vmem [thread:$0]  %s308, 16, %s310, %s300
        $region28: #{tpu_custom_call.1} parent=19 // pred_fallthru
          _
      $region20: #{tpu_custom_call.1} parent=5 // pred_fallthru
        _
      %p313 = scmp.le.s32.totalorder 1, %s22
      %p314 = scmp.lt.s32.totalorder %s22, 4
      %p315 = pnand %p313, %p314
      %p316 = pneg %p315
      // Predicated region
      $region29: #{tpu_custom_call.1} parent=5 // pred_check
        _
      $region30: #{tpu_custom_call.1} parent=5 // pred_check_branch
        %318 = sbr.rel (%p315) target = $region32
      $region31: #{tpu_custom_call.1} parent=5 // pred_region
        %s319 = ssub.s32 %s22, 1
        // Predicated region
        $region33: #{tpu_custom_call.1} parent=31 // pred_check
          %p320 = pneg %p69
        $region34: #{tpu_custom_call.1} parent=31 // pred_check_branch
          %322 = sbr.rel (%p320) target = $region36
        $region35: #{tpu_custom_call.1} parent=31 // pred_region
          %324 = dma.done [#allocation4], 256
        $region36: #{tpu_custom_call.1} parent=31 // pred_fallthru
          _
        %s325 = sand.u32 %s27, 1
        %s326 = scalar_lea.sflag [#allocation7], %s325
        %s327 = sand.u32 %s84, 1
        %s328 = smul.addr %s327, 128
        %s329 = scalar_lea.vmem [#allocation6], %s328
        // Predicated region
        $region37: #{tpu_custom_call.1} parent=31 // pred_check
          %p330 = pneg %p97
        $region38: #{tpu_custom_call.1} parent=31 // pred_check_branch
          %332 = sbr.rel (%p330) target = $region40
        $region39: #{tpu_custom_call.1} parent=31 // pred_region
          %334 = dma.done %s326, 2048
        $region40: #{tpu_custom_call.1} parent=31 // pred_fallthru
          _
        %s335 = sand.u32 %s27, 1
        %s336 = scalar_lea.sflag [#allocation7], %s335
        %s337 = sand.u32 %s110, 1
        %s338 = scalar_lea.vmem [#allocation8], %s337
        // Predicated region
        $region41: #{tpu_custom_call.1} parent=31 // pred_check
          %p339 = pneg %p123
        $region42: #{tpu_custom_call.1} parent=31 // pred_check_branch
          %341 = sbr.rel (%p339) target = $region44
        $region43: #{tpu_custom_call.1} parent=31 // pred_region
          %343 = dma.done %s336, 16
        $region44: #{tpu_custom_call.1} parent=31 // pred_fallthru
          _
        %p344 = pneg %p69
        %p345 = pneg %p66
        %s346 = sand.u32 %s27, 1
        %s347 = scalar_lea.sflag [#allocation7], %s346
        %s348 = sand.u32 %s84, 1
        %s349 = smul.addr %s348, 128
        %s350 = scalar_lea.vmem [#allocation6], %s349
        %p351 = pneg %p97
        %p352 = pneg %p94
        %s353 = sand.u32 %s27, 1
        %s354 = scalar_lea.sflag [#allocation7], %s353
        %s355 = sand.u32 %s110, 1
        %s356 = scalar_lea.vmem [#allocation8], %s355
        %p357 = pneg %p123
        %p358 = pneg %p120
        %p359 = pneg %p159
        %p360 = pneg %p156
        %s361 = sand.u32 %s146, 1
        %s362 = scalar_lea.sflag [#allocation5], %s361
        %s363 = sand.u32 %s146, 1
        %s364 = smul.addr %s363, 16
        %s365 = scalar_lea.vmem [#allocation9], %s364
        %p366 = pneg %p197
        %p367 = pneg %p194
        %s368 = sand.u32 %s27, 1
        %s369 = scalar_lea.sflag [#allocation11], %s368
        %s370 = sand.u32 %s184, 1
        %s371 = smul.addr %s370, 16
        %s372 = scalar_lea.vmem [#allocation10], %s371
        %p373 = pneg %p235
        %p374 = pneg %p232
        %s375 = sand.u32 %s27, 1
        %s376 = scalar_lea.sflag [#allocation11], %s375
        %s377 = sand.u32 %s222, 1
        %s378 = smul.addr %s377, 16
        %s379 = scalar_lea.vmem [#allocation12], %s378
        %s380 = smul.u32 2, %s32
        %s381 = smul.u32 16, %s34
        %p382 = scmp.gt.s32.totalorder %s33, 0
        %s383 = scalar_select %p382, %s33, 0
        %p384 = scmp.lt.s32.totalorder %s383, 0
        %s385 = scalar_select %p384, %s383, 0
        %s386 = smul.u32 2, %s32
        %s387 = ssub.s32 %s33, 1
        %p388 = scmp.gt.s32.totalorder %s387, 0
        %s389 = scalar_select %p388, %s387, 0
        %p390 = scmp.lt.s32.totalorder %s389, 0
        %s391 = scalar_select %p390, %s389, 0
        %s392 = smul.u32 2, %s32
        %s393 = ssub.s32 %s33, 2
        %p394 = scmp.gt.s32.totalorder %s393, 0
        %s395 = scalar_select %p394, %s393, 0
        %p396 = scmp.lt.s32.totalorder %s395, 0
        %s397 = scalar_select %p396, %s395, 0
        %s398 = smul.u32 2, %s32
        %p399 = scmp.eq.s32.totalorder %s34, 0
        // Predicated region
        $region45: #{tpu_custom_call.1} parent=31 // pred_check
          %p400 = pneg %p399
        $region46: #{tpu_custom_call.1} parent=31 // pred_check_branch
          %402 = sbr.rel (%p400) target = $region48
        $region47: #{tpu_custom_call.1} parent=31 // pred_region
          %403 = vst [vmem:[#allocation2] sm:$0xff] 0.0
          %404 = vst [vmem:[#allocation2 + $0x8] sm:$0xff] 0.0
        $region48: #{tpu_custom_call.1} parent=31 // pred_fallthru
          _
        %v405 = vld [vmem:[#allocation2] sm:$0xff]
        %v406 = vld [vmem:[#allocation2 + $0x8] sm:$0xff]
        %v407 = vld [vmem:[#allocation3] sm:$0xff]
        %v408 = vld [vmem:[#allocation3 + $0x8] sm:$0xff]
        %v409 = vld [vmem:[%s329] sm:$0xff]
        %v410 = vld [vmem:[%s329 + $0x8] sm:$0xff]
        %v411 = vld [vmem:[%s329 + $0x10] sm:$0xff]
        %v412 = vld [vmem:[%s329 + $0x18] sm:$0xff]
        %v413 = vld [vmem:[%s329 + $0x20] sm:$0xff]
        %v414 = vld [vmem:[%s329 + $0x28] sm:$0xff]
        %v415 = vld [vmem:[%s329 + $0x30] sm:$0xff]
        %v416 = vld [vmem:[%s329 + $0x38] sm:$0xff]
        %v417 = vld [vmem:[%s329 + $0x40] sm:$0xff]
        %v418 = vld [vmem:[%s329 + $0x48] sm:$0xff]
        %v419 = vld [vmem:[%s329 + $0x50] sm:$0xff]
        %v420 = vld [vmem:[%s329 + $0x58] sm:$0xff]
        %v421 = vld [vmem:[%s329 + $0x60] sm:$0xff]
        %v422 = vld [vmem:[%s329 + $0x68] sm:$0xff]
        %v423 = vld [vmem:[%s329 + $0x70] sm:$0xff]
        %v424 = vld [vmem:[%s329 + $0x78] sm:$0xff]
        %425 = vmatpush.msra.mxu0 %v424
        %426 = vmatpush.msra.mxu0 %v423
        %427 = vmatpush.msra.mxu0 %v422
        %428 = vmatpush.msra.mxu0 %v421
        %429 = vmatpush.msra.mxu0 %v420
        %430 = vmatpush.msra.mxu0 %v419
        %431 = vmatpush.msra.mxu0 %v418
        %432 = vmatpush.msra.mxu0 %v417
        %433 = vmatpush.msra.mxu0 %v416
        %434 = vmatpush.msra.mxu0 %v415
        %435 = vmatpush.msra.mxu0 %v414
        %436 = vmatpush.msra.mxu0 %v413
        %437 = vmatpush.msra.mxu0 %v412
        %438 = vmatpush.msra.mxu0 %v411
        %439 = vmatpush.msra.mxu0 %v410
        %440 = vmatpush.msra.mxu0 %v409
        %441 = vmatmul.f32.gmra.mxu0 %v407
        %v442 = vpop.f32.mrf.mxu0
        %v443 = vadd.f32 0.0, %v442
        %444 = vmatmul.f32.gmra.mxu0 %v408
        %v445 = vpop.f32.mrf.mxu0
        %v446 = vadd.f32 0.0, %v445
        %447 = vdwg.mxu0
        %v448 = vadd.f32 %v405, %v443
        %v449 = vadd.f32 %v406, %v446
        %450 = vst [vmem:[#allocation2] sm:$0xff] %v448
        %451 = vst [vmem:[#allocation2 + $0x8] sm:$0xff] %v449
        // Predicated region
        $region49: #{tpu_custom_call.1} parent=31 // pred_check
          %p452 = pneg %p399
        $region50: #{tpu_custom_call.1} parent=31 // pred_check_branch
          %454 = sbr.rel (%p452) target = $region52
        $region51: #{tpu_custom_call.1} parent=31 // pred_region
          %v455 = vld [vmem:[#allocation2] sm:$0xff]
          %v456 = vld [vmem:[#allocation2 + $0x8] sm:$0xff]
          %v457 = vld [vmem:[%s338] sm:$0x1]
          %v459 = vperm.slane %v457, 0
          %v461 = vadd.f32 %v455, %v459
          %v462 = vadd.f32 %v456, %v459
          %p463 = scmp.ge.s32.totalorder %s33, 0
          %p464 = scmp.lt.s32.totalorder %s33, 1
          %p465 = pnand %p463, %p464
          %p466 = pneg %p465
          // Predicated region
          $region53: #{tpu_custom_call.1} parent=51 // pred_check
            _
          $region54: #{tpu_custom_call.1} parent=51 // pred_check_branch
            %468 = sbr.rel (%p465) target = $region56
          $region55: #{tpu_custom_call.1} parent=51 // pred_region
            %469 = vst [vmem:[%s365] sm:$0xff] %v461
            %470 = vst [vmem:[%s365 + $0x8] sm:$0xff] %v462
          $region56: #{tpu_custom_call.1} parent=51 // pred_fallthru
            _
          %p471 = scmp.ge.s32.totalorder %s33, 1
          %p472 = scmp.lt.s32.totalorder %s33, 2
          %p473 = pnand %p471, %p472
          %p474 = pneg %p473
          // Predicated region
          $region57: #{tpu_custom_call.1} parent=51 // pred_check
            _
          $region58: #{tpu_custom_call.1} parent=51 // pred_check_branch
            %476 = sbr.rel (%p473) target = $region60
          $region59: #{tpu_custom_call.1} parent=51 // pred_region
            %477 = vst [vmem:[%s372] sm:$0xff] %v461
            %478 = vst [vmem:[%s372 + $0x8] sm:$0xff] %v462
          $region60: #{tpu_custom_call.1} parent=51 // pred_fallthru
            _
          %p479 = scmp.ge.s32.totalorder %s33, 2
          %p480 = scmp.lt.s32.totalorder %s33, 3
          %p481 = pnand %p479, %p480
          %p482 = pneg %p481
          // Predicated region
          $region61: #{tpu_custom_call.1} parent=51 // pred_check
            _
          $region62: #{tpu_custom_call.1} parent=51 // pred_check_branch
            %484 = sbr.rel (%p481) target = $region64
          $region63: #{tpu_custom_call.1} parent=51 // pred_region
            %485 = vst [vmem:[%s379] sm:$0xff] %v461
            %486 = vst [vmem:[%s379 + $0x8] sm:$0xff] %v462
          $region64: #{tpu_custom_call.1} parent=51 // pred_fallthru
            _
        $region52: #{tpu_custom_call.1} parent=31 // pred_fallthru
          _
        %s487 = sand.u32 %s146, 1
        %s488 = scalar_lea.sflag [#allocation5], %s487
        %s489 = sand.u32 %s146, 1
        %s490 = smul.addr %s489, 16
        %s491 = scalar_lea.vmem [#allocation9], %s490
        %s492 = sand.u32 %s27, 1
        %s493 = scalar_lea.sflag [#allocation11], %s492
        %s494 = sand.u32 %s184, 1
        %s495 = smul.addr %s494, 16
        %s496 = scalar_lea.vmem [#allocation10], %s495
        %s497 = sand.u32 %s27, 1
        %s498 = scalar_lea.sflag [#allocation11], %s497
        %s499 = sand.u32 %s222, 1
        %s500 = smul.addr %s499, 16
        %s501 = scalar_lea.vmem [#allocation12], %s500
        // Predicated region
        $region65: #{tpu_custom_call.1} parent=31 // pred_check
          %p502 = pneg %p156
        $region66: #{tpu_custom_call.1} parent=31 // pred_check_branch
          %504 = sbr.rel (%p502) target = $region68
        $region67: #{tpu_custom_call.1} parent=31 // pred_region
          %p505 = scmp.gt.s32.totalorder %s33, 0
          %s506 = scalar_select %p505, %s33, 0
          %p507 = scmp.lt.s32.totalorder %s506, 0
          %s508 = scalar_select %p507, %s506, 0
          %s509 = smul.u32 2, %s32
          %511 = vsyncadd %s488, 0
          %s512 = sadd.s32 %s508, %s509
          %s513 = smul.addr %s512, 8
          %s514 = scalar_lea.hbm %s3, %s513
          %s515 = sshll.u32 %s491, 4
          %s516 = int_to_ptr.vmem [resolvable:$true] %s515
          %s517 = sshll.u32 %s514, 4
          %s518 = int_to_ptr.hbm [resolvable:$true] %s517
          %523 = dma.vmem_to_hbm [thread:$0]  %s516, 256, %s518, %s488, 128, 128, 8
        $region68: #{tpu_custom_call.1} parent=31 // pred_fallthru
          _
        // Predicated region
        $region69: #{tpu_custom_call.1} parent=31 // pred_check
          %p524 = pneg %p194
        $region70: #{tpu_custom_call.1} parent=31 // pred_check_branch
          %526 = sbr.rel (%p524) target = $region72
        $region71: #{tpu_custom_call.1} parent=31 // pred_region
          %s527 = ssub.s32 %s33, 1
          %p528 = scmp.gt.s32.totalorder %s527, 0
          %s529 = scalar_select %p528, %s527, 0
          %p530 = scmp.lt.s32.totalorder %s529, 0
          %s531 = scalar_select %p530, %s529, 0
          %s532 = smul.u32 2, %s32
          %534 = vsyncadd %s493, 0
          %s535 = sadd.s32 %s531, %s532
          %s536 = smul.addr %s535, 8
          %s537 = scalar_lea.hbm %s4, %s536
          %s538 = sshll.u32 %s496, 4
          %s539 = int_to_ptr.vmem [resolvable:$true] %s538
          %s540 = sshll.u32 %s537, 4
          %s541 = int_to_ptr.hbm [resolvable:$true] %s540
          %546 = dma.vmem_to_hbm [thread:$0]  %s539, 256, %s541, %s493, 128, 128, 8
        $region72: #{tpu_custom_call.1} parent=31 // pred_fallthru
          _
        // Predicated region
        $region73: #{tpu_custom_call.1} parent=31 // pred_check
          %p547 = pneg %p232
        $region74: #{tpu_custom_call.1} parent=31 // pred_check_branch
          %549 = sbr.rel (%p547) target = $region76
        $region75: #{tpu_custom_call.1} parent=31 // pred_region
          %s550 = ssub.s32 %s33, 2
          %p551 = scmp.gt.s32.totalorder %s550, 0
          %s552 = scalar_select %p551, %s550, 0
          %p553 = scmp.lt.s32.totalorder %s552, 0
          %s554 = scalar_select %p553, %s552, 0
          %s555 = smul.u32 2, %s32
          %557 = vsyncadd %s498, 0
          %s558 = sadd.s32 %s554, %s555
          %s559 = smul.addr %s558, 8
          %s560 = scalar_lea.hbm %s5, %s559
          %s561 = sshll.u32 %s501, 4
          %s562 = int_to_ptr.vmem [resolvable:$true] %s561
          %s563 = sshll.u32 %s560, 4
          %s564 = int_to_ptr.hbm [resolvable:$true] %s563
          %569 = dma.vmem_to_hbm [thread:$0]  %s562, 256, %s564, %s498, 128, 128, 8
        $region76: #{tpu_custom_call.1} parent=31 // pred_fallthru
          _
      $region32: #{tpu_custom_call.1} parent=5 // pred_fallthru
        _
      %p570 = scmp.le.s32.totalorder 2, %s22
      // Predicated region
      $region77: #{tpu_custom_call.1} parent=5 // pred_check
        %p571 = pneg %p570
      $region78: #{tpu_custom_call.1} parent=5 // pred_check_branch
        %573 = sbr.rel (%p571) target = $region80
      $region79: #{tpu_custom_call.1} parent=5 // pred_region
        %s574 = ssub.s32 %s22, 2
        // Predicated region
        $region81: #{tpu_custom_call.1} parent=79 // pred_check
          %p575 = pneg %p162
        $region82: #{tpu_custom_call.1} parent=79 // pred_check_branch
          %577 = sbr.rel (%p575) target = $region84
        $region83: #{tpu_custom_call.1} parent=79 // pred_region
          %s578 = sand.u32 %s147, 1
          %s579 = scalar_lea.sflag [#allocation5], %s578
          %s580 = sand.u32 %s147, 1
          %s581 = smul.addr %s580, 16
          %s582 = scalar_lea.vmem [#allocation9], %s581
          %584 = dma.done %s579, 256
        $region84: #{tpu_custom_call.1} parent=79 // pred_fallthru
          _
        // Predicated region
        $region85: #{tpu_custom_call.1} parent=79 // pred_check
          %p585 = pneg %p200
        $region86: #{tpu_custom_call.1} parent=79 // pred_check_branch
          %587 = sbr.rel (%p585) target = $region88
        $region87: #{tpu_custom_call.1} parent=79 // pred_region
          %s588 = sand.u32 %s28, 1
          %s589 = scalar_lea.sflag [#allocation11], %s588
          %s590 = sand.u32 %s185, 1
          %s591 = smul.addr %s590, 16
          %s592 = scalar_lea.vmem [#allocation10], %s591
          %594 = dma.done %s589, 256
        $region88: #{tpu_custom_call.1} parent=79 // pred_fallthru
          _
        // Predicated region
        $region89: #{tpu_custom_call.1} parent=79 // pred_check
          %p595 = pneg %p238
        $region90: #{tpu_custom_call.1} parent=79 // pred_check_branch
          %597 = sbr.rel (%p595) target = $region92
        $region91: #{tpu_custom_call.1} parent=79 // pred_region
          %s598 = sand.u32 %s28, 1
          %s599 = scalar_lea.sflag [#allocation11], %s598
          %s600 = sand.u32 %s223, 1
          %s601 = smul.addr %s600, 16
          %s602 = scalar_lea.vmem [#allocation12], %s601
          %604 = dma.done %s599, 256
        $region92: #{tpu_custom_call.1} parent=79 // pred_fallthru
          _
      $region80: #{tpu_custom_call.1} parent=5 // pred_fallthru
        _
    $region6: #{tpu_custom_call.1} parent=1 // loop_footer
      %s26 = sadd.s32 1, %s22
    $region7: #{tpu_custom_call.1} parent=1 // loop_footer_branch
      %21 = sbr.rel target = $region3
    $region8: #{tpu_custom_call.1} parent=1 // loop_exit
      _
    %605 = vsyncpa [#allocation4], 1
    %s606 = scalar_lea.sflag [#allocation4], 1
    %607 = vsyncpa %s606, 1
    %608 = vsyncpa [#allocation7], 1
    %s609 = scalar_lea.sflag [#allocation7], 1
    %610 = vsyncpa %s609, 1
    %611 = vsyncpa [#allocation5], 1
    %s612 = scalar_lea.sflag [#allocation5], 1
    %613 = vsyncpa %s612, 1
    %614 = vsyncpa [#allocation11], 1
    %s615 = scalar_lea.sflag [#allocation11], 1
    %616 = vsyncpa %s615, 1

</llo_original>
